<compile_context>
chip_gen: v7x
topology: tpu7x:2x2x1
jax: 0.10.0
libtpu: 0.0.40
codegen_flags: <defaults>
</compile_context>

<pallas_src>
import jax
import jax.numpy as jnp
from jax.experimental import pallas as pl
from jax.experimental.pallas import tpu as pltpu


def _vnmaxpool_kernel(x_ref, w_ref, out_ref):
    # x_ref:  [Bt, C, 3N]  native layout: channels on sublanes, samples on lanes
    # w_ref:  [C, C]       map_to_dir.weight (out, in), used untransposed
    # out_ref:[Bt, C, 3]   pooled 3-vector per channel (PyTorch output layout)
    bt, c, kn = x_ref.shape
    n = kn // 3
    w = w_ref[...]

    for b in range(bt):                       # Bt is small & static -> unrolled
        xs = x_ref[b]                         # [C, 3N]

        # Direction map: one lane-dense MXU matmul covering all 3 components.
        d = jnp.dot(w, xs, preferred_element_type=jnp.float32)        # [C, 3N]
        p = xs * d                                                     # [C, 3N]

        # k-reduction over the 3 spatial components (lane-aligned slices).
        dot = p[:, 0:n] + p[:, n:2 * n] + p[:, 2 * n:3 * n]            # [C, N]

        # argmax over samples (lane axis) per channel, first-index tie-break.
        # NOTE: m is the max of this exact `dot` tensor, so `dot == m` always
        # hits at least one lane per channel (keep both in the same precision).
        m = jnp.max(dot, axis=1, keepdims=True)                        # [C, 1]
        iota_n = jax.lax.broadcasted_iota(jnp.int32, (c, n), 1)        # [C, N]
        cand = jnp.where(dot == m, iota_n, n)
        first = jnp.min(cand, axis=1, keepdims=True)                   # [C, 1]
        onehot = (iota_n == first).astype(xs.dtype)                    # [C, N]

        # Gather-free selection: masked lane reduction per spatial component,
        # combined into a single dense [C, 3] store (no concat / relayout).
        sel_cols = [
            jnp.sum(xs[:, k * n:(k + 1) * n] * onehot, axis=1, keepdims=True)
            for k in range(3)
        ]                                                              # 3x[C,1]
        lane3 = jax.lax.broadcasted_iota(jnp.int32, (c, 3), 1)         # [C, 3]
        sel3 = jnp.where(lane3 == 0, sel_cols[0],
                         jnp.where(lane3 == 1, sel_cols[1], sel_cols[2]))
        out_ref[b] = sel3.astype(out_ref.dtype)


def _pick_batch_tile(batch):
    # Amortize per-grid-step overhead, but keep >= 2 grid steps so both v7x
    # TensorCores get work (harmless on single-TC v5e/v6e).
    for bt in (8, 4, 2):
        if batch % bt == 0 and batch // bt >= 2:
            return bt
    return 1


def vnmaxpool_forward(x, w):
    """x: [B, C, 3, N] (native PyTorch layout); w: [C, C] = map_to_dir.weight."""
    B, C, K, N = x.shape
    assert K == 3
    assert C % 8 == 0, "channels should be a multiple of 8 (sublane tiling)"
    assert N % 128 == 0, ("samples should be a multiple of 128 so the per-"
                          "component lane slices stay aligned (pad upstream or "
                          "switch to pltpu.roll otherwise)")

    bt = _pick_batch_tile(B)
    kn = 3 * N
    x_slab = x.reshape(B, C, kn)              # free contiguous reshape, no copy
    itemsize = x.dtype.itemsize

    cost = pl.CostEstimate(
        flops=2 * B * C * C * kn + 6 * B * C * kn,
        transcendentals=0,
        bytes_accessed=(B * C * kn + C * C + B * C * 3) * itemsize)

    # VMEM budget: double-buffered input block + double-buffered weight.
    block_bytes = 2 * bt * C * kn * itemsize + 2 * C * C * itemsize
    compiler_kwargs = dict(dimension_semantics=("parallel",))
    if block_bytes > 24 * 1024 * 1024:
        # Raise the scoped-VMEM limit for big C/N; cap at v7x's 64 MiB VMEM.
        compiler_kwargs["vmem_limit_bytes"] = min(
            int(block_bytes * 5 // 4), 64 * 1024 * 1024)

    out = pl.pallas_call(
        _vnmaxpool_kernel,
        out_shape=jax.ShapeDtypeStruct((B, C, 3), x.dtype),
        grid_spec=pltpu.PrefetchScalarGridSpec(
            num_scalar_prefetch=0,
            grid=(B // bt,),
            in_specs=[
                pl.BlockSpec((bt, C, kn), lambda i: (i, 0, 0)),
                pl.BlockSpec((C, C), lambda i: (0, 0)),   # weight stays resident
            ],
            out_specs=pl.BlockSpec((bt, C, 3), lambda i: (i, 0, 0)),
        ),
        compiler_params=pltpu.CompilerParams(**compiler_kwargs),
        cost_estimate=cost,
    )(x_slab, w)
    return out                                 # [B, C, 3] — PyTorch output layout


def vnmaxpool_reference(x, w):
    """Pure-JAX reference matching the PyTorch forward exactly."""
    B, C, K, N = x.shape
    d = jnp.einsum('oc,bckn->bokn', w, x,
                   precision=jax.lax.Precision.HIGHEST)   # [B, C, 3, N]
    dot = jnp.sum(x * d, axis=2)                          # [B, C, N]
    idx = jnp.argmax(dot, axis=-1)                        # [B, C]
    b_idx = jnp.arange(B)[:, None, None]
    c_idx = jnp.arange(C)[None, :, None]
    k_idx = jnp.arange(K)[None, None, :]
    return x[b_idx, c_idx, k_idx, idx[:, :, None]]        # [B, C, 3]


if __name__ == "__main__":
    # Small shapes consistent with the module: batch=2, in_channels=32,
    # samples=128 (multiple of 128 for lane-aligned component slices).
    B, C, N = 2, 32, 128

    key = jax.random.PRNGKey(0)
    kx, kw = jax.random.split(key, 2)
    x = jax.random.normal(kx, (B, C, 3, N), jnp.float32)
    w = jax.random.normal(kw, (C, C), jnp.float32) * 0.1   # map_to_dir.weight

    out = vnmaxpool_forward(x, w)
    jax.block_until_ready(out)

    ref = vnmaxpool_reference(x, w)
    assert out.shape == (B, C, 3)
    assert jnp.allclose(out, ref, atol=1e-5, rtol=1e-5)

    print("KERNEL_OK")
</pallas_src>

<mosaic_0001>
module attributes {stable_mosaic.version = 11 : i64} {
  func.func @_vnmaxpool_kernel(%arg0: i32, %arg1: memref<1x32x384xf32, #tpu.memory_space<vmem>>, %arg2: memref<32x32xf32, #tpu.memory_space<vmem>>, %arg3: memref<1x32x3xf32, #tpu.memory_space<vmem>>) attributes {dimension_semantics = [#tpu.dimension_semantics<parallel>], iteration_bounds = array<i64: 2>, scalar_prefetch = 0 : i64, scratch_operands = 0 : i64, tpu.core_type = #tpu.core_type<tc>, window_params = [{transform_indices = @transform_0, window_bounds = array<i64: 1, 32, 384>}, {pipeline_mode = #tpu.pipeline_mode<synchronous>, transform_indices = @transform_1, window_bounds = array<i64: 32, 32>}, {transform_indices = @transform_2, window_bounds = array<i64: 1, 32, 3>}]} {
    %c0 = arith.constant 0 : index
    %c0_0 = arith.constant 0 : index
    %0 = vector.load %arg2[%c0, %c0_0] : memref<32x32xf32, #tpu.memory_space<vmem>>, vector<32x32xf32>
    %c0_1 = arith.constant 0 : index
    %c0_2 = arith.constant 0 : index
    %c0_3 = arith.constant 0 : index
    %1 = vector.load %arg1[%c0_1, %c0_2, %c0_3] : memref<1x32x384xf32, #tpu.memory_space<vmem>>, vector<1x32x384xf32>
    %2 = vector.shape_cast %1 : vector<1x32x384xf32> to vector<32x384xf32>
    %cst = arith.constant dense<0.000000e+00> : vector<32x384xf32>
    %3 = tpu.matmul %0, %2, %cst {dimension_numbers = #tpu.dot_dimension_numbers<[1], [0], [0], [1], [0, 0, 1, 1], [], []>} : vector<32x32xf32>, vector<32x384xf32>, vector<32x384xf32> -> vector<32x384xf32>
    %4 = arith.mulf %2, %3 : vector<32x384xf32>
    %5 = vector.extract_strided_slice %4 {offsets = [0, 0], sizes = [32, 128], strides = [1, 1]} : vector<32x384xf32> to vector<32x128xf32>
    %6 = vector.extract_strided_slice %4 {offsets = [0, 128], sizes = [32, 128], strides = [1, 1]} : vector<32x384xf32> to vector<32x128xf32>
    %7 = arith.addf %5, %6 : vector<32x128xf32>
    %8 = vector.extract_strided_slice %4 {offsets = [0, 256], sizes = [32, 128], strides = [1, 1]} : vector<32x384xf32> to vector<32x128xf32>
    %9 = arith.addf %7, %8 : vector<32x128xf32>
    %cst_4 = arith.constant dense<0xFF800000> : vector<32xf32>
    %10 = vector.multi_reduction <maximumf>, %9, %cst_4 [1] : vector<32x128xf32> to vector<32xf32>
    %11 = vector.shape_cast %10 : vector<32xf32> to vector<32x1xf32>
    %12 = tpu.iota {dimensions = array<i32: 1>} : vector<32x128xi32>
    %13 = vector.broadcast %11 : vector<32x1xf32> to vector<32x128xf32>
    %14 = arith.cmpf oeq, %9, %13 : vector<32x128xf32>
    %c128_i32 = arith.constant 128 : i32
    %15 = vector.broadcast %c128_i32 : i32 to vector<32x128xi32>
    %16 = arith.select %14, %12, %15 : vector<32x128xi1>, vector<32x128xi32>
    %cst_5 = arith.constant dense<2147483647> : vector<32xi32>
    %17 = vector.multi_reduction <minsi>, %16, %cst_5 [1] : vector<32x128xi32> to vector<32xi32>
    %18 = vector.shape_cast %17 : vector<32xi32> to vector<32x1xi32>
    %19 = vector.broadcast %18 : vector<32x1xi32> to vector<32x128xi32>
    %20 = arith.cmpi eq, %12, %19 : vector<32x128xi32>
    %21 = arith.extui %20 : vector<32x128xi1> to vector<32x128xi32>
    %22 = arith.sitofp %21 : vector<32x128xi32> to vector<32x128xf32>
    %23 = vector.extract_strided_slice %2 {offsets = [0, 0], sizes = [32, 128], strides = [1, 1]} : vector<32x384xf32> to vector<32x128xf32>
    %24 = arith.mulf %23, %22 : vector<32x128xf32>
    %cst_6 = arith.constant dense<0.000000e+00> : vector<32xf32>
    %25 = vector.multi_reduction <add>, %24, %cst_6 [1] : vector<32x128xf32> to vector<32xf32>
    %26 = vector.shape_cast %25 : vector<32xf32> to vector<32x1xf32>
    %27 = vector.extract_strided_slice %2 {offsets = [0, 128], sizes = [32, 128], strides = [1, 1]} : vector<32x384xf32> to vector<32x128xf32>
    %28 = arith.mulf %27, %22 : vector<32x128xf32>
    %cst_7 = arith.constant dense<0.000000e+00> : vector<32xf32>
    %29 = vector.multi_reduction <add>, %28, %cst_7 [1] : vector<32x128xf32> to vector<32xf32>
    %30 = vector.shape_cast %29 : vector<32xf32> to vector<32x1xf32>
    %31 = vector.extract_strided_slice %2 {offsets = [0, 256], sizes = [32, 128], strides = [1, 1]} : vector<32x384xf32> to vector<32x128xf32>
    %32 = arith.mulf %31, %22 : vector<32x128xf32>
    %cst_8 = arith.constant dense<0.000000e+00> : vector<32xf32>
    %33 = vector.multi_reduction <add>, %32, %cst_8 [1] : vector<32x128xf32> to vector<32xf32>
    %34 = vector.shape_cast %33 : vector<32xf32> to vector<32x1xf32>
    %35 = tpu.iota {dimensions = array<i32: 1>} : vector<32x3xi32>
    %c0_i32 = arith.constant 0 : i32
    %36 = vector.broadcast %c0_i32 : i32 to vector<32x3xi32>
    %37 = arith.cmpi eq, %35, %36 : vector<32x3xi32>
    %c1_i32 = arith.constant 1 : i32
    %38 = vector.broadcast %c1_i32 : i32 to vector<32x3xi32>
    %39 = arith.cmpi eq, %35, %38 : vector<32x3xi32>
    %40 = vector.shape_cast %30 : vector<32x1xf32> to vector<32x1xf32>
    %41 = vector.broadcast %40 : vector<32x1xf32> to vector<32x3xf32>
    %42 = vector.shape_cast %34 : vector<32x1xf32> to vector<32x1xf32>
    %43 = vector.broadcast %42 : vector<32x1xf32> to vector<32x3xf32>
    %44 = arith.select %39, %41, %43 : vector<32x3xi1>, vector<32x3xf32>
    %45 = vector.shape_cast %26 : vector<32x1xf32> to vector<32x1xf32>
    %46 = vector.broadcast %45 : vector<32x1xf32> to vector<32x3xf32>
    %47 = arith.select %37, %46, %44 : vector<32x3xi1>, vector<32x3xf32>
    %c0_9 = arith.constant 0 : index
    %c0_10 = arith.constant 0 : index
    %c0_11 = arith.constant 0 : index
    %48 = vector.load %arg3[%c0_9, %c0_10, %c0_11] : memref<1x32x3xf32, #tpu.memory_space<vmem>>, vector<1x32x3xf32>
    %49 = vector.shape_cast %48 : vector<1x32x3xf32> to vector<32x3xf32>
    %50 = vector.shape_cast %47 : vector<32x3xf32> to vector<1x32x3xf32>
    tpu.vector_store %arg3[%c0_9, %c0_10, %c0_11], %50 {strides = array<i32>} : memref<1x32x3xf32, #tpu.memory_space<vmem>>, vector<1x32x3xf32>,
    return
  }
  func.func @transform_0(%arg0: i32) -> (i32, i32, i32) {
    %c0_i32 = arith.constant 0 : i32
    %c0_i32_0 = arith.constant 0 : i32
    %c0_i32_1 = arith.constant 0 : i32
    return %arg0, %c0_i32, %c0_i32_0 : i32, i32, i32
  }
  func.func @transform_1(%arg0: i32) -> (i32, i32) {
    %c0_i32 = arith.constant 0 : i32
    %c0_i32_0 = arith.constant 0 : i32
    %c0_i32_1 = arith.constant 0 : i32
    return %c0_i32, %c0_i32_0 : i32, i32
  }
  func.func @transform_2(%arg0: i32) -> (i32, i32, i32) {
    %c0_i32 = arith.constant 0 : i32
    %c0_i32_0 = arith.constant 0 : i32
    %c0_i32_1 = arith.constant 0 : i32
    return %arg0, %c0_i32, %c0_i32_0 : i32, i32, i32
  }
}

</mosaic_0001>

<llo_original>
// kernel: tpu_custom_call.1
$region0: #{tpu_custom_call.1}
  #allocation0 [shape = 'u32[]', space=smem, size = 0x4, offset = 0x4, fixed_abs, tag = 'smem constant byte address 0x4 - core index']
  #allocation1 [shape = 'u32[144,128]{1,0:T(1,128)}', space=vmem, size = 0x12000, scoped, tag = 'internal scratch']
  %s0 = inlined_call_operand.hbm [shape: f32[2,32,384], index: 0, kind: input, shape index: {}]
  %s1 = inlined_call_operand.hbm [shape: f32[32,32], index: 1, kind: input, shape index: {}]
  %s2 = inlined_call_operand.vmem [shape: f32[2,32,3], index: 2, kind: output, shape index: {}]
  %s3 = sld [smem:[#allocation0]]
  $region49: #{tpu_custom_call.1} parent=0
    _
  %s5 = ssub.s32 1, %s3
  %s6 = scalar_select 0, %s5, %s3
  $region1: #{tpu_custom_call.1} parent=0
    #allocation2 [shape = 'u8[98304]{0}', space=vmem, size = 0x18000, scoped, tag = 'input window, operand 0']
    #allocation3 [shape = 's32[2]{0}', space=sflag, size = 0x8, scoped, tag = 'scoped memory for tpu_custom_call.1']
    #allocation4 [shape = 'u8[16384]{0}', space=vmem, size = 0x4000, scoped, tag = 'input window, operand 1, single buffered']
    #allocation5 [shape = 's32[1]{0}', space=sflag, size = 0x4, scoped, tag = 'scoped memory for tpu_custom_call.1']
    %7 = vsyncpa [#allocation3], 0
    %s8 = scalar_lea.sflag [#allocation3], 1
    %9 = vsyncpa %s8, 0
    %10 = vsyncpa [#allocation5], 0
    loop: start=0, step=1, limit=4
    $region2: #{tpu_custom_call.1} parent=1 // loop_pre_header
      _
    $region3: #{tpu_custom_call.1} parent=1 // loop_header
      %s12 = sphi 0, %s16
      %p13 = scmp.ge.s32.totalorder %s12, 4
      %s22 = sphi 0, %s24
      %s25 = sphi 0, %s22
      %s26 = sphi 0, %s25
      %s42 = sphi 0, %s26
      %s46 = sphi 0, %s46
      %s48 = sphi 0, %s46
      %s49 = sphi 0, %s48
      %s63 = sphi 0, %s49
      %s69 = sphi 0, %s71
      %s72 = sphi 0, %s69
      %s73 = sphi 0, %s72
      %s89 = sphi 0, %s73
    $region4: #{tpu_custom_call.1} parent=1 // loop_header_branch
      %15 = sbr.rel (%p13) target = $region8
    $region5: #{tpu_custom_call.1} parent=1 // loop_body
      %s17 = ssub.s32 %s12, 1
      %s18 = ssub.s32 %s12, 2
      %s19 = sadd.s32 %s12, 1
      %s20 = ssub.s32 %s12, %s19
      %p21 = scmp.eq.s32.totalorder %s20, 0
      %s23 = sadd.s32 %s22, 1
      %s24 = scalar_select %p21, %s22, %s23
      %p27 = pneg %p21
      %p28 = scmp.eq.s32.totalorder %s12, 1
      %p29 = por %p27, %p28
      %p30 = scmp.ne.s32.totalorder %s22, %s25
      %p31 = scmp.eq.s32.totalorder %s12, 0
      %p32 = por %p30, %p31
      %p33 = scmp.ne.s32.totalorder %s22, %s25
      %p34 = scmp.eq.s32.totalorder %s17, 1
      %p35 = por %p33, %p34
      %p36 = scmp.ne.s32.totalorder %s25, %s26
      %p37 = scmp.eq.s32.totalorder %s17, 0
      %p38 = por %p36, %p37
      %p39 = scmp.ne.s32.totalorder %s25, %s26
      %p40 = scmp.eq.s32.totalorder %s18, 1
      %p41 = por %p39, %p40
      %p43 = scmp.ne.s32.totalorder %s26, %s42
      %p44 = scmp.eq.s32.totalorder %s18, 0
      %p45 = por %p43, %p44
      %s47 = sadd.s32 %s46, 1
      %p50 = scmp.eq.s32.totalorder %s12, 1
      %p51 = scmp.ne.s32.totalorder %s46, %s48
      %p52 = scmp.eq.s32.totalorder %s12, 0
      %p53 = por %p51, %p52
      %p54 = scmp.ne.s32.totalorder %s46, %s48
      %p55 = scmp.eq.s32.totalorder %s17, 1
      %p56 = por %p54, %p55
      %p57 = scmp.ne.s32.totalorder %s48, %s49
      %p58 = scmp.eq.s32.totalorder %s17, 0
      %p59 = por %p57, %p58
      %p60 = scmp.ne.s32.totalorder %s48, %s49
      %p61 = scmp.eq.s32.totalorder %s18, 1
      %p62 = por %p60, %p61
      %p64 = scmp.ne.s32.totalorder %s49, %s63
      %p65 = scmp.eq.s32.totalorder %s18, 0
      %p66 = por %p64, %p65
      %s67 = ssub.s32 %s12, %s19
      %p68 = scmp.eq.s32.totalorder %s67, 0
      %s70 = sadd.s32 %s69, 1
      %s71 = scalar_select %p68, %s69, %s70
      %p74 = pneg %p68
      %p75 = scmp.eq.s32.totalorder %s12, 1
      %p76 = por %p74, %p75
      %p77 = scmp.ne.s32.totalorder %s69, %s72
      %p78 = scmp.eq.s32.totalorder %s12, 0
      %p79 = por %p77, %p78
      %p80 = scmp.ne.s32.totalorder %s69, %s72
      %p81 = scmp.eq.s32.totalorder %s17, 1
      %p82 = por %p80, %p81
      %p83 = scmp.ne.s32.totalorder %s72, %s73
      %p84 = scmp.eq.s32.totalorder %s17, 0
      %p85 = por %p83, %p84
      %p86 = scmp.ne.s32.totalorder %s72, %s73
      %p87 = scmp.eq.s32.totalorder %s18, 1
      %p88 = por %p86, %p87
      %p90 = scmp.ne.s32.totalorder %s73, %s89
      %p91 = scmp.eq.s32.totalorder %s18, 0
      %p92 = por %p90, %p91
      %p93 = scmp.le.s32.totalorder 1, %s12
      %p94 = scmp.lt.s32.totalorder %s12, 3
      %p95 = pnand %p93, %p94
      %p96 = pneg %p95
      // Predicated region
      $region9: #{tpu_custom_call.1} parent=5 // pred_check
        _
      $region10: #{tpu_custom_call.1} parent=5 // pred_check_branch
        %98 = sbr.rel (%p95) target = $region12
      $region11: #{tpu_custom_call.1} parent=5 // pred_region
        %s99 = ssub.s32 %s12, 1
        // Predicated region
        $region13: #{tpu_custom_call.1} parent=11 // pred_check
          %p100 = pneg %p59
        $region14: #{tpu_custom_call.1} parent=11 // pred_check_branch
          %102 = sbr.rel (%p100) target = $region16
        $region15: #{tpu_custom_call.1} parent=11 // pred_region
          %s104 = ssub.s32 512, 512
          %105 = vsyncadd [#allocation5], %s104
          %s106 = sshll.u32 [#allocation4], 4
          %s107 = int_to_ptr.vmem [resolvable:$true] %s106
          %112 = dma.hbm_to_vmem [thread:$0]  %s1, 512, %s107, [#allocation5], 128, 128, 8
        $region16: #{tpu_custom_call.1} parent=11 // pred_fallthru
          _
      $region12: #{tpu_custom_call.1} parent=5 // pred_fallthru
        _
      %p113 = scmp.lt.s32.totalorder %s12, 2
      // Predicated region
      $region17: #{tpu_custom_call.1} parent=5 // pred_check
        %p114 = pneg %p113
      $region18: #{tpu_custom_call.1} parent=5 // pred_check_branch
        %116 = sbr.rel (%p114) target = $region20
      $region19: #{tpu_custom_call.1} parent=5 // pred_region
        // Predicated region
        $region21: #{tpu_custom_call.1} parent=19 // pred_check
          %p117 = pneg %p32
        $region22: #{tpu_custom_call.1} parent=19 // pred_check_branch
          %119 = sbr.rel (%p117) target = $region24
        $region23: #{tpu_custom_call.1} parent=19 // pred_region
          %s120 = sand.u32 %s22, 1
          %s121 = scalar_lea.sflag [#allocation3], %s120
          %s122 = sand.u32 %s22, 1
          %s123 = smul.addr %s122, 96
          %s124 = scalar_lea.vmem [#allocation2], %s123
          %s126 = ssub.s32 1536, 1536
          %127 = vsyncadd %s121, %s126
          %s128 = smul.addr %s12, 12
          %s129 = smul.addr %s128, 128
          %s130 = scalar_lea.hbm %s0, %s129
          %s131 = sshll.u32 %s124, 4
          %s132 = int_to_ptr.vmem [resolvable:$true] %s131
          %137 = dma.hbm_to_vmem [thread:$0]  %s130, 1536, %s132, %s121, 384, 384, 24
        $region24: #{tpu_custom_call.1} parent=19 // pred_fallthru
          _
      $region20: #{tpu_custom_call.1} parent=5 // pred_fallthru
        _
      %p138 = scmp.le.s32.totalorder 1, %s12
      %p139 = scmp.lt.s32.totalorder %s12, 3
      %p140 = pnand %p138, %p139
      %p141 = pneg %p140
      // Predicated region
      $region25: #{tpu_custom_call.1} parent=5 // pred_check
        _
      $region26: #{tpu_custom_call.1} parent=5 // pred_check_branch
        %143 = sbr.rel (%p140) target = $region28
      $region27: #{tpu_custom_call.1} parent=5 // pred_region
        %s144 = ssub.s32 %s12, 1
        %s145 = sand.u32 %s25, 1
        %s146 = scalar_lea.sflag [#allocation3], %s145
        %s147 = sand.u32 %s25, 1
        %s148 = smul.addr %s147, 96
        %s149 = scalar_lea.vmem [#allocation2], %s148
        // Predicated region
        $region29: #{tpu_custom_call.1} parent=27 // pred_check
          %p150 = pneg %p38
        $region30: #{tpu_custom_call.1} parent=27 // pred_check_branch
          %152 = sbr.rel (%p150) target = $region32
        $region31: #{tpu_custom_call.1} parent=27 // pred_region
          %153 = dma.done %s146, 1536
        $region32: #{tpu_custom_call.1} parent=27 // pred_fallthru
          _
        // Predicated region
        $region33: #{tpu_custom_call.1} parent=27 // pred_check
          %p154 = pneg %p59
        $region34: #{tpu_custom_call.1} parent=27 // pred_check_branch
          %156 = sbr.rel (%p154) target = $region36
        $region35: #{tpu_custom_call.1} parent=27 // pred_region
          %157 = dma.done [#allocation5], 512
        $region36: #{tpu_custom_call.1} parent=27 // pred_fallthru
          _
        %s158 = sand.u32 %s25, 1
        %s159 = scalar_lea.sflag [#allocation3], %s158
        %s160 = sand.u32 %s25, 1
        %s161 = smul.addr %s160, 96
        %s162 = scalar_lea.vmem [#allocation2], %s161
        %p163 = pneg %p38
        %p164 = pneg %p35
        %p165 = pneg %p59
        %p166 = pneg %p56
        %p167 = pneg %p85
        %p168 = pneg %p82
        %p169 = scmp.lt.s32.totalorder %s17, 1
        %s170 = scalar_select %p169, %s17, 1
        %s171 = smul.addr %s170, 4
        %s172 = smul.addr %s171, 8
        %s173 = scalar_lea.vmem %s2, %s172
        %p174 = scmp.lt.s32.totalorder %s17, 1
        %s175 = scalar_select %p174, %s17, 1
        %s176 = smul.addr %s175, 4
        %s177 = smul.addr %s176, 8
        %s178 = scalar_lea.vmem %s2, %s177
        %v179 = vld [vmem:[#allocation4] sm:$0xff]
        %v180 = vld [vmem:[#allocation4 + $0x8] sm:$0xff]
        %v181 = vld [vmem:[#allocation4 + $0x10] sm:$0xff]
        %v182 = vld [vmem:[#allocation4 + $0x18] sm:$0xff]
        %v183 = vld [vmem:[%s149] sm:$0xff]
        %v184 = vld [vmem:[%s149 + $0x8] sm:$0xff]
        %v185 = vld [vmem:[%s149 + $0x10] sm:$0xff]
        %v186 = vld [vmem:[%s149 + $0x18] sm:$0xff]
        %v187 = vld [vmem:[%s149 + $0x20] sm:$0xff]
        %v188 = vld [vmem:[%s149 + $0x28] sm:$0xff]
        %v189 = vld [vmem:[%s149 + $0x30] sm:$0xff]
        %v190 = vld [vmem:[%s149 + $0x38] sm:$0xff]
        %v191 = vld [vmem:[%s149 + $0x40] sm:$0xff]
        %v192 = vld [vmem:[%s149 + $0x48] sm:$0xff]
        %v193 = vld [vmem:[%s149 + $0x50] sm:$0xff]
        %v194 = vld [vmem:[%s149 + $0x58] sm:$0xff]
        %vm195 = vcmask 261120
        %v197 = vsel %vm195, %v179, 0
        %v200 = vsel %vm195, %v180, 0
        %v203 = vsel %vm195, %v181, 0
        %v206 = vsel %vm195, %v182, 0
        %208 = vmatprep.subr.mxu0 %v184
        %209 = vmatpush1.msra.mxu0 %v183
        %210 = vmatprep.subr.mxu0 %v187
        %211 = vmatpush1.msra.mxu0 %v186
        %212 = vmatprep.subr.mxu0 %v190
        %213 = vmatpush1.msra.mxu0 %v189
        %214 = vmatprep.subr.mxu0 %v193
        %215 = vmatpush1.msra.mxu0 %v192
        %216 = vmatprep.subr.mxu0 0.0
        %217 = vmatpush1.msra.mxu0 0.0
        %218 = vmatprep.subr.mxu0 0.0
        %219 = vmatpush1.msra.mxu0 0.0
        %220 = vmatprep.subr.mxu0 0.0
        %221 = vmatpush1.msra.mxu0 0.0
        %222 = vmatprep.subr.mxu0 0.0
        %223 = vmatpush1.msra.mxu0 0.0
        %224 = vmatprep.subr.mxu0 0.0
        %225 = vmatpush1.msra.mxu0 0.0
        %226 = vmatprep.subr.mxu0 0.0
        %227 = vmatpush1.msra.mxu0 0.0
        %228 = vmatprep.subr.mxu0 0.0
        %229 = vmatpush1.msra.mxu0 0.0
        %230 = vmatprep.subr.mxu0 0.0
        %231 = vmatpush1.msra.mxu0 0.0
        %232 = vmatprep.subr.mxu0 0.0
        %233 = vmatpush1.msra.mxu0 0.0
        %234 = vmatprep.subr.mxu0 0.0
        %235 = vmatpush1.msra.mxu0 0.0
        %236 = vmatprep.subr.mxu0 0.0
        %237 = vmatpush1.msra.mxu0 0.0
        %238 = vmatprep.subr.mxu0 0.0
        %239 = vmatpush1.msra.mxu0 0.0
        %240 = vmatprep.subr.mxu0 0.0
        %241 = vmatpush1.msra.mxu0 0.0
        %242 = vmatprep.subr.mxu0 0.0
        %243 = vmatpush1.msra.mxu0 0.0
        %244 = vmatprep.subr.mxu0 0.0
        %245 = vmatpush1.msra.mxu0 0.0
        %246 = vmatprep.subr.mxu0 0.0
        %247 = vmatpush1.msra.mxu0 0.0
        %248 = vmatprep.subr.mxu0 0.0
        %249 = vmatpush1.msra.mxu0 0.0
        %250 = vmatprep.subr.mxu0 0.0
        %251 = vmatpush1.msra.mxu0 0.0
        %252 = vmatprep.subr.mxu0 0.0
        %253 = vmatpush1.msra.mxu0 0.0
        %254 = vmatprep.subr.mxu0 0.0
        %255 = vmatpush1.msra.mxu0 0.0
        %256 = vmatprep.subr.mxu0 0.0
        %257 = vmatpush1.msra.mxu0 0.0
        %258 = vmatprep.subr.mxu0 0.0
        %259 = vmatpush1.msra.mxu0 0.0
        %260 = vmatprep.subr.mxu0 0.0
        %261 = vmatpush1.msra.mxu0 0.0
        %262 = vmatprep.subr.mxu0 0.0
        %263 = vmatpush1.msra.mxu0 0.0
        %264 = vmatprep.subr.mxu0 0.0
        %265 = vmatpush1.msra.mxu0 0.0
        %266 = vmatprep.subr.mxu0 0.0
        %267 = vmatpush1.msra.mxu0 0.0
        %268 = vmatprep.subr.mxu0 0.0
        %269 = vmatpush1.msra.mxu0 0.0
        %270 = vmatprep.subr.mxu0 0.0
        %271 = vmatpush1.msra.mxu0 0.0
        %272 = vmatprep.mubr.f32.mxu0 0.0
        %273 = vmatmul.mubr.f32.gmra.mrb[0].mxu0 %v197
        %v274 = vpop.f32.mrb[0].mxu0
        %v275 = vadd.f32 0.0, %v274
        %v276 = vpop.f32.mrb[0].mxu0
        %v277 = vadd.f32 0.0, %v276
        %278 = vmatprep.mubr.f32.mxu0 0.0
        %279 = vmatmul.mubr.f32.gmra.mrb[0].mxu0 %v200
        %v280 = vpop.f32.mrb[0].mxu0
        %v281 = vadd.f32 0.0, %v280
        %v282 = vpop.f32.mrb[0].mxu0
        %v283 = vadd.f32 0.0, %v282
        %284 = vmatprep.mubr.f32.mxu0 0.0
        %285 = vmatmul.mubr.f32.gmra.mrb[0].mxu0 %v203
        %v286 = vpop.f32.mrb[0].mxu0
        %v287 = vadd.f32 0.0, %v286
        %v288 = vpop.f32.mrb[0].mxu0
        %v289 = vadd.f32 0.0, %v288
        %290 = vmatprep.mubr.f32.mxu0 0.0
        %291 = vmatmul.mubr.f32.gmra.mrb[0].mxu0 %v206
        %v292 = vpop.f32.mrb[0].mxu0
        %v293 = vadd.f32 0.0, %v292
        %v294 = vpop.f32.mrb[0].mxu0
        %v295 = vadd.f32 0.0, %v294
        %296 = vdwg.mxu0
        %297 = vmatprep.subr.mxu0 0.0
        %298 = vmatpush1.msra.mxu0 %v185
        %299 = vmatprep.subr.mxu0 0.0
        %300 = vmatpush1.msra.mxu0 %v188
        %301 = vmatprep.subr.mxu0 0.0
        %302 = vmatpush1.msra.mxu0 %v191
        %303 = vmatprep.subr.mxu0 0.0
        %304 = vmatpush1.msra.mxu0 %v194
        %305 = vmatprep.subr.mxu0 0.0
        %306 = vmatpush1.msra.mxu0 0.0
        %307 = vmatprep.subr.mxu0 0.0
        %308 = vmatpush1.msra.mxu0 0.0
        %309 = vmatprep.subr.mxu0 0.0
        %310 = vmatpush1.msra.mxu0 0.0
        %311 = vmatprep.subr.mxu0 0.0
        %312 = vmatpush1.msra.mxu0 0.0
        %313 = vmatprep.subr.mxu0 0.0
        %314 = vmatpush1.msra.mxu0 0.0
        %315 = vmatprep.subr.mxu0 0.0
        %316 = vmatpush1.msra.mxu0 0.0
        %317 = vmatprep.subr.mxu0 0.0
        %318 = vmatpush1.msra.mxu0 0.0
        %319 = vmatprep.subr.mxu0 0.0
        %320 = vmatpush1.msra.mxu0 0.0
        %321 = vmatprep.subr.mxu0 0.0
        %322 = vmatpush1.msra.mxu0 0.0
        %323 = vmatprep.subr.mxu0 0.0
        %324 = vmatpush1.msra.mxu0 0.0
        %325 = vmatprep.subr.mxu0 0.0
        %326 = vmatpush1.msra.mxu0 0.0
        %327 = vmatprep.subr.mxu0 0.0
        %328 = vmatpush1.msra.mxu0 0.0
        %329 = vmatprep.subr.mxu0 0.0
        %330 = vmatpush1.msra.mxu0 0.0
        %331 = vmatprep.subr.mxu0 0.0
        %332 = vmatpush1.msra.mxu0 0.0
        %333 = vmatprep.subr.mxu0 0.0
        %334 = vmatpush1.msra.mxu0 0.0
        %335 = vmatprep.subr.mxu0 0.0
        %336 = vmatpush1.msra.mxu0 0.0
        %337 = vmatprep.subr.mxu0 0.0
        %338 = vmatpush1.msra.mxu0 0.0
        %339 = vmatprep.subr.mxu0 0.0
        %340 = vmatpush1.msra.mxu0 0.0
        %341 = vmatprep.subr.mxu0 0.0
        %342 = vmatpush1.msra.mxu0 0.0
        %343 = vmatprep.subr.mxu0 0.0
        %344 = vmatpush1.msra.mxu0 0.0
        %345 = vmatprep.subr.mxu0 0.0
        %346 = vmatpush1.msra.mxu0 0.0
        %347 = vmatprep.subr.mxu0 0.0
        %348 = vmatpush1.msra.mxu0 0.0
        %349 = vmatprep.subr.mxu0 0.0
        %350 = vmatpush1.msra.mxu0 0.0
        %351 = vmatprep.subr.mxu0 0.0
        %352 = vmatpush1.msra.mxu0 0.0
        %353 = vmatprep.subr.mxu0 0.0
        %354 = vmatpush1.msra.mxu0 0.0
        %355 = vmatprep.subr.mxu0 0.0
        %356 = vmatpush1.msra.mxu0 0.0
        %357 = vmatprep.subr.mxu0 0.0
        %358 = vmatpush1.msra.mxu0 0.0
        %359 = vmatprep.subr.mxu0 0.0
        %360 = vmatpush1.msra.mxu0 0.0
        %361 = vmatprep.mubr.f32.mxu0 0.0
        %362 = vmatmul.mubr.f32.gmra.mrb[0].mxu0 %v197
        %v363 = vpop.f32.mrb[0].mxu0
        %v364 = vadd.f32 0.0, %v363
        %v365 = vpop.f32.mrb[0].mxu0
        %366 = vmatprep.mubr.f32.mxu0 0.0
        %367 = vmatmul.mubr.f32.gmra.mrb[0].mxu0 %v200
        %v368 = vpop.f32.mrb[0].mxu0
        %v369 = vadd.f32 0.0, %v368
        %v370 = vpop.f32.mrb[0].mxu0
        %371 = vmatprep.mubr.f32.mxu0 0.0
        %372 = vmatmul.mubr.f32.gmra.mrb[0].mxu0 %v203
        %v373 = vpop.f32.mrb[0].mxu0
        %v374 = vadd.f32 0.0, %v373
        %v375 = vpop.f32.mrb[0].mxu0
        %376 = vmatprep.mubr.f32.mxu0 0.0
        %377 = vmatmul.mubr.f32.gmra.mrb[0].mxu0 %v206
        %v378 = vpop.f32.mrb[0].mxu0
        %v379 = vadd.f32 0.0, %v378
        %v380 = vpop.f32.mrb[0].mxu0
        %381 = vdwg.mxu0
        %v382 = vmul.f32 %v183, %v275
        %v383 = vmul.f32 %v184, %v277
        %v384 = vmul.f32 %v185, %v364
        %v385 = vmul.f32 %v186, %v281
        %v386 = vmul.f32 %v187, %v283
        %v387 = vmul.f32 %v188, %v369
        %v388 = vmul.f32 %v189, %v287
        %v389 = vmul.f32 %v190, %v289
        %v390 = vmul.f32 %v191, %v374
        %v391 = vmul.f32 %v192, %v293
        %v392 = vmul.f32 %v193, %v295
        %v393 = vmul.f32 %v194, %v379
        %v394 = vadd.f32 %v382, %v383
        %v395 = vadd.f32 %v385, %v386
        %v396 = vadd.f32 %v388, %v389
        %v397 = vadd.f32 %v391, %v392
        %v398 = vadd.f32 %v394, %v384
        %v399 = vadd.f32 %v395, %v387
        %v400 = vadd.f32 %v396, %v390
        %v401 = vadd.f32 %v397, %v393
        %402 = vmax.xlane.f32.xlu0 %v398
        %v403 = vpop.xlane.xlu0 %402
        %404 = vmax.xlane.f32.xlu0 %v399
        %v405 = vpop.xlane.xlu0 %404
        %406 = vmax.xlane.f32.xlu0 %v400
        %v407 = vpop.xlane.xlu0 %406
        %408 = vmax.xlane.f32.xlu0 %v401
        %v409 = vpop.xlane.xlu0 %408
        %v410 = vlaneseq
        %v411 = vand.u32 %v410, 127
        %vm412 = vcmp.eq.f32.partialorder %v398, %v403
        %vm413 = vcmp.eq.f32.partialorder %v399, %v405
        %vm414 = vcmp.eq.f32.partialorder %v400, %v407
        %vm415 = vcmp.eq.f32.partialorder %v401, %v409
        %v416 = vsel %vm412, %v411, 128
        %v417 = vsel %vm413, %v411, 128
        %v418 = vsel %vm414, %v411, 128
        %v419 = vsel %vm415, %v411, 128
        %v420 = vand.u32 %v416, 65535
        %v421 = vshra.s32 %v416, 16
        %v422 = vcvt.s32.f32 %v420
        %v423 = vcvt.s32.f32 %v421
        %424 = vmin.xlane.f32.xlu0 %v423
        %v425 = vpop.xlane.xlu0 %424
        %vm426 = vcmp.eq.f32.partialorder %v423, %v425
        %v427 = vsel %vm426, %v422, inf
        %428 = vmin.xlane.f32.xlu0 %v427
        %v429 = vpop.xlane.xlu0 %428
        %v430 = vcvt.f32.s32 %v429
        %v431 = vcvt.f32.s32 %v425
        %v432 = vshll.u32 %v431, 16
        %v433 = vadd.s32 %v432, %v430
        %v434 = vand.u32 %v417, 65535
        %v435 = vshra.s32 %v417, 16
        %v436 = vcvt.s32.f32 %v434
        %v437 = vcvt.s32.f32 %v435
        %438 = vmin.xlane.f32.xlu0 %v437
        %v439 = vpop.xlane.xlu0 %438
        %vm440 = vcmp.eq.f32.partialorder %v437, %v439
        %v441 = vsel %vm440, %v436, inf
        %442 = vmin.xlane.f32.xlu0 %v441
        %v443 = vpop.xlane.xlu0 %442
        %v444 = vcvt.f32.s32 %v443
        %v445 = vcvt.f32.s32 %v439
        %v446 = vshll.u32 %v445, 16
        %v447 = vadd.s32 %v446, %v444
        %v448 = vand.u32 %v418, 65535
        %v449 = vshra.s32 %v418, 16
        %v450 = vcvt.s32.f32 %v448
        %v451 = vcvt.s32.f32 %v449
        %452 = vmin.xlane.f32.xlu0 %v451
        %v453 = vpop.xlane.xlu0 %452
        %vm454 = vcmp.eq.f32.partialorder %v451, %v453
        %v455 = vsel %vm454, %v450, inf
        %456 = vmin.xlane.f32.xlu0 %v455
        %v457 = vpop.xlane.xlu0 %456
        %v458 = vcvt.f32.s32 %v457
        %v459 = vcvt.f32.s32 %v453
        %v460 = vshll.u32 %v459, 16
        %v461 = vadd.s32 %v460, %v458
        %v462 = vand.u32 %v419, 65535
        %v463 = vshra.s32 %v419, 16
        %v464 = vcvt.s32.f32 %v462
        %v465 = vcvt.s32.f32 %v463
        %466 = vmin.xlane.f32.xlu0 %v465
        %v467 = vpop.xlane.xlu0 %466
        %vm468 = vcmp.eq.f32.partialorder %v465, %v467
        %v469 = vsel %vm468, %v464, inf
        %470 = vmin.xlane.f32.xlu0 %v469
        %v471 = vpop.xlane.xlu0 %470
        %v472 = vcvt.f32.s32 %v471
        %v473 = vcvt.f32.s32 %v467
        %v474 = vshll.u32 %v473, 16
        %v475 = vadd.s32 %v474, %v472
        %vm476 = vcmp.eq.s32.totalorder %v411, %v433
        %vm477 = vcmp.eq.s32.totalorder %v411, %v447
        %vm478 = vcmp.eq.s32.totalorder %v411, %v461
        %vm479 = vcmp.eq.s32.totalorder %v411, %v475
        %v480 = vsel %vm476, 1, 0
        %v481 = vsel %vm477, 1, 0
        %v482 = vsel %vm478, 1, 0
        %v483 = vsel %vm479, 1, 0
        %v484 = vcvt.s32.f32 %v480
        %v485 = vcvt.s32.f32 %v481
        %v486 = vcvt.s32.f32 %v482
        %v487 = vcvt.s32.f32 %v483
        %v488 = vmul.f32 %v183, %v484
        %v489 = vmul.f32 %v186, %v485
        %v490 = vmul.f32 %v189, %v486
        %v491 = vmul.f32 %v192, %v487
        %492 = vadd.xlane.f32.xlu0 %v488
        %v493 = vpop.xlane.xlu0 %492
        %494 = vadd.xlane.f32.xlu0 %v489
        %v495 = vpop.xlane.xlu0 %494
        %496 = vadd.xlane.f32.xlu0 %v490
        %v497 = vpop.xlane.xlu0 %496
        %498 = vadd.xlane.f32.xlu0 %v491
        %v499 = vpop.xlane.xlu0 %498
        %v500 = vmul.f32 %v184, %v484
        %v501 = vmul.f32 %v187, %v485
        %v502 = vmul.f32 %v190, %v486
        %v503 = vmul.f32 %v193, %v487
        %504 = vadd.xlane.f32.xlu0 %v500
        %v505 = vpop.xlane.xlu0 %504
        %506 = vadd.xlane.f32.xlu0 %v501
        %v507 = vpop.xlane.xlu0 %506
        %508 = vadd.xlane.f32.xlu0 %v502
        %v509 = vpop.xlane.xlu0 %508
        %510 = vadd.xlane.f32.xlu0 %v503
        %v511 = vpop.xlane.xlu0 %510
        %v512 = vmul.f32 %v185, %v484
        %v513 = vmul.f32 %v188, %v485
        %v514 = vmul.f32 %v191, %v486
        %v515 = vmul.f32 %v194, %v487
        %516 = vadd.xlane.f32.xlu0 %v512
        %v517 = vpop.xlane.xlu0 %516
        %518 = vadd.xlane.f32.xlu0 %v513
        %v519 = vpop.xlane.xlu0 %518
        %520 = vadd.xlane.f32.xlu0 %v514
        %v521 = vpop.xlane.xlu0 %520
        %522 = vadd.xlane.f32.xlu0 %v515
        %v523 = vpop.xlane.xlu0 %522
        %vm524 = vcmp.eq.s32.totalorder %v411, 0
        %vm525 = vcmp.eq.s32.totalorder %v411, 1
        %v526 = vsel %vm525, %v505, %v517
        %v527 = vsel %vm525, %v507, %v519
        %v528 = vsel %vm525, %v509, %v521
        %v529 = vsel %vm525, %v511, %v523
        %v530 = vsel %vm524, %v493, %v526
        %v531 = vsel %vm524, %v495, %v527
        %v532 = vsel %vm524, %v497, %v528
        %v533 = vsel %vm524, %v499, %v529
        %vm534 = vcmask 23552
        %535 = vst.msk [vmem:[%s178] sm:$0xff] %vm534, %v530
        %536 = vst.msk [vmem:[%s178 + $0x8] sm:$0xff] %vm534, %v531
        %537 = vst.msk [vmem:[%s178 + $0x10] sm:$0xff] %vm534, %v532
        %538 = vst.msk [vmem:[%s178 + $0x18] sm:$0xff] %vm534, %v533
        %p539 = scmp.lt.s32.totalorder %s17, 1
        %s540 = scalar_select %p539, %s17, 1
        %s541 = smul.addr %s540, 4
        %s542 = smul.addr %s541, 8
        %s543 = scalar_lea.vmem %s2, %s542
        // Predicated region
        $region37: #{tpu_custom_call.1} parent=27 // pred_check
          %p544 = pneg %p82
        $region38: #{tpu_custom_call.1} parent=27 // pred_check_branch
          %546 = sbr.rel (%p544) target = $region40
        $region39: #{tpu_custom_call.1} parent=27 // pred_region
          _
        $region40: #{tpu_custom_call.1} parent=27 // pred_fallthru
          _
      $region28: #{tpu_custom_call.1} parent=5 // pred_fallthru
        _
      %p547 = scmp.le.s32.totalorder 2, %s12
      // Predicated region
      $region41: #{tpu_custom_call.1} parent=5 // pred_check
        %p548 = pneg %p547
      $region42: #{tpu_custom_call.1} parent=5 // pred_check_branch
        %550 = sbr.rel (%p548) target = $region44
      $region43: #{tpu_custom_call.1} parent=5 // pred_region
        %s551 = ssub.s32 %s12, 2
        // Predicated region
        $region45: #{tpu_custom_call.1} parent=43 // pred_check
          %p552 = pneg %p88
        $region46: #{tpu_custom_call.1} parent=43 // pred_check_branch
          %554 = sbr.rel (%p552) target = $region48
        $region47: #{tpu_custom_call.1} parent=43 // pred_region
          %p555 = scmp.lt.s32.totalorder %s18, 1
          %s556 = scalar_select %p555, %s18, 1
          %s557 = smul.addr %s556, 4
          %s558 = smul.addr %s557, 8
          %s559 = scalar_lea.vmem %s2, %s558
        $region48: #{tpu_custom_call.1} parent=43 // pred_fallthru
          _
      $region44: #{tpu_custom_call.1} parent=5 // pred_fallthru
        _
    $region6: #{tpu_custom_call.1} parent=1 // loop_footer
      %s16 = sadd.s32 1, %s12
    $region7: #{tpu_custom_call.1} parent=1 // loop_footer_branch
      %11 = sbr.rel target = $region3
    $region8: #{tpu_custom_call.1} parent=1 // loop_exit
      _
    %560 = vsyncpa [#allocation3], 1
    %s561 = scalar_lea.sflag [#allocation3], 1
    %562 = vsyncpa %s561, 1
    %563 = vsyncpa [#allocation5], 1

</llo_original>
